<compile_context>
chip_gen: v5e
topology: v5e:2x2
jax: 0.10.0
libtpu: 0.0.40
codegen_flags: <defaults>
</compile_context>

<pallas_src>
import jax
import jax.numpy as jnp
from jax.experimental import pallas as pl
from jax.experimental.pallas import tpu as pltpu


def _make_cbam_kernel(bt, C, H, W):
    HW = H * W

    def kernel(x_ref, w1t_ref, b1_ref, w2t_ref, b2_ref, bm_ref,
               ws_ref, bs_ref, o_ref):
        x = x_ref[...]                                       # (bt, C, HW) f32

        # ---------------- channel attention (MXU matmuls) ----------------
        mx = jnp.max(x, axis=2)                              # (bt, C)
        av = jnp.mean(x, axis=2)                             # (bt, C)
        pooled = jnp.concatenate([mx, av], axis=0)           # (2*bt, C)
        h = jnp.dot(pooled, w1t_ref[...],
                    preferred_element_type=jnp.float32) + b1_ref[...]
        z = jnp.dot(h, w2t_ref[...],
                    preferred_element_type=jnp.float32) + b2_ref[...]
        gate = jax.nn.sigmoid(z[:bt] + z[bt:])               # (bt, C)

        # -------- spatial attention: dense 2-D (bt, HW) roll+mask conv ----
        # TODO(synk): if vld ever becomes the binding slot, fuse the max/mean
        # reductions into single running-(max,sum) passes over HW / C chunks.
        smax = jnp.max(x, axis=1)                            # (bt, HW)
        smean = jnp.mean(x, axis=1)                          # (bt, HW)

        bm = bm_ref[...]                                     # (4, HW) 0/1 base masks
        row_m = {-1: bm[0:1], +1: bm[1:2]}                   # (1, HW) each
        col_m = {-1: bm[2:3], +1: bm[3:4]}

        # 3x3 "SAME" conv on the flattened maps: XLU roll + boundary mask,
        # accumulated into a single running (bt, HW) tensor.
        acc = None
        for ky in range(3):
            for kx in range(3):
                tap = ky * 3 + kx
                dy, dx = ky - 1, kx - 1
                src_off = dy * W + dx                        # out[p] reads in[p+src_off]
                if src_off == 0:
                    sh_max, sh_mean = smax, smean
                else:
                    amt = (-src_off) % HW
                    sh_max = pltpu.roll(smax, shift=amt, axis=1)
                    sh_mean = pltpu.roll(smean, shift=amt, axis=1)
                contrib = ws_ref[tap] * sh_max + ws_ref[9 + tap] * sh_mean
                m = None
                if dy != 0:
                    m = row_m[dy]
                if dx != 0:
                    m = col_m[dx] if m is None else m * col_m[dx]
                if m is not None:
                    contrib = m * contrib
                acc = contrib if acc is None else acc + contrib
        sp = jax.nn.sigmoid(acc + bs_ref[0])                 # (bt, HW)

        # Single fused read-x / write-out pass (no block-sized `ca` temp).
        o_ref[...] = (gate[:, :, None] * (sp[:, None, :] * x)).astype(o_ref.dtype)

    return kernel


def cbam_pallas(x, w1, b1, w2, b2, ws, bs):
    B, C, H, W = x.shape
    C2 = w1.shape[0]
    HW = H * W

    # Lane-dense layout: fold spatial dims into one contiguous last axis (free).
    x3 = x.reshape(B, C, HW)

    # MLP params as matmul-ready matrices / row biases.
    w1t = w1.reshape(C2, C).T                    # (C, C2)
    b1r = b1.reshape(1, C2)
    w2t = w2.reshape(C, C2).T                    # (C2, C)
    b2r = b2.reshape(1, C)

    # Spatial conv taps + bias -> SMEM scalars.
    ws_flat = ws.reshape(18)                     # [9 taps for max-map | 9 for mean-map]
    bs_flat = bs.reshape(1)

    # 4 base boundary masks (row-up, row-down, col-left, col-right) for the
    # flattened zero-padded 3x3 conv; the kernel builds corner masks on the fly.
    rr = jnp.arange(HW, dtype=jnp.int32) // W
    cc = jnp.arange(HW, dtype=jnp.int32) % W
    base_masks = jnp.stack(
        [rr >= 1, rr <= H - 2, cc >= 1, cc <= W - 2]).astype(jnp.float32)  # (4, HW)

    # ---------------- per-generation block sizing ----------------
    try:
        vmem_cap = pltpu.get_tpu_info().vmem_capacity_bytes
    except Exception:
        vmem_cap = 64 * 1024 * 1024              # conservative (v7x per-TensorCore)
    # Scoped VMEM request ~3/4 of per-core VMEM (96 MiB cap for 128-MiB v5e/v6e,
    # ~48 MiB on 64-MiB v7x); block budget leaves room for 2x-in + 2x-out double
    # buffers plus one fused block-sized temporary.
    vmem_limit = max(32 * 1024 * 1024, min(vmem_cap * 3 // 4, 96 * 1024 * 1024))
    budget_bytes = vmem_limit // 6

    per_batch_bytes = C * HW * x.dtype.itemsize
    cands = [c for c in range(B, 0, -1)
             if B % c == 0 and c * per_batch_bytes <= budget_bytes]
    if not cands:
        # TODO(synk): for shapes where even a single (1, C, H*W) slab exceeds the
        # budget, split the pooling into a reduction pass (grid over HW/C with
        # VMEM accumulators + conv halo handling) and scale in a second pass.
        cands = [1]
    multi = [c for c in cands if B // c >= 2]    # >=2 grid steps: megacore + pipeline
    if multi:
        cands = multi
    aligned = [c for c in cands if c % 8 == 0]   # sublane-aligned (bt, HW) path
    bt = (aligned or cands)[0]                   # descending order -> largest fit
    grid = (B // bt,)

    kernel = _make_cbam_kernel(bt, C, H, W)

    out3 = pl.pallas_call(
        kernel,
        out_shape=jax.ShapeDtypeStruct((B, C, HW), x.dtype),
        grid=grid,
        in_specs=[
            pl.BlockSpec((bt, C, HW), lambda b: (b, 0, 0)),      # x (lane-dense)
            pl.BlockSpec((C, C2), lambda b: (0, 0)),             # MLP W1^T
            pl.BlockSpec((1, C2), lambda b: (0, 0)),             # MLP b1
            pl.BlockSpec((C2, C), lambda b: (0, 0)),             # MLP W2^T
            pl.BlockSpec((1, C), lambda b: (0, 0)),              # MLP b2
            pl.BlockSpec((4, HW), lambda b: (0, 0)),             # base boundary masks
            pl.BlockSpec(memory_space=pltpu.MemorySpace.SMEM),   # conv taps (18,)
            pl.BlockSpec(memory_space=pltpu.MemorySpace.SMEM),   # conv bias (1,)
        ],
        out_specs=pl.BlockSpec((bt, C, HW), lambda b: (b, 0, 0)),
        compiler_params=pltpu.CompilerParams(
            dimension_semantics=("parallel",),   # megacore: split batch across TCs
            vmem_limit_bytes=vmem_limit,
        ),
    )(x3, w1t, b1r, w2t, b2r, base_masks, ws_flat, bs_flat)

    return out3.reshape(B, C, H, W)


def cbam_ref(x, w1, b1, w2, b2, ws, bs):
    """Pure-JAX reference matching PyTorch semantics (for verification)."""
    B, C, H, W = x.shape
    mx = jnp.max(x, axis=(2, 3))                     # (B, C)
    av = jnp.mean(x, axis=(2, 3))                    # (B, C)

    def mlp(v):                                      # (B, C)
        h = v @ w1.T + b1.reshape(1, -1)             # (B, C//2)
        return h @ w2.T + b2.reshape(1, -1)          # (B, C)

    ch = jax.nn.sigmoid(mlp(mx) + mlp(av))[:, :, None, None]
    ca = ch * x

    sp_in = jnp.stack([jnp.max(x, axis=1), jnp.mean(x, axis=1)], axis=1)  # (B,2,H,W)
    conv = jax.lax.conv_general_dilated(
        sp_in, ws.reshape(1, 2, 3, 3), (1, 1), "SAME",
        dimension_numbers=("NCHW", "OIHW", "NCHW"),
    ) + bs.reshape(1, 1, 1, 1)
    sp = jax.nn.sigmoid(conv)                        # (B,1,H,W)
    return sp * ca


if __name__ == "__main__":
    B, C, H, W = 2, 4, 16, 16
    C2 = C // 2

    key = jax.random.PRNGKey(0)
    kx, k1, k2, k3, k4, k5, k6 = jax.random.split(key, 7)

    x = jax.random.normal(kx, (B, C, H, W), jnp.float32)

    # Deterministic synthetic parameters (shapes from the module __init__).
    w1 = 0.2 * jax.random.normal(k1, (C2, C), jnp.float32)    # Conv2d(C, C/2, 1).weight
    b1 = 0.1 * jax.random.normal(k2, (C2, 1), jnp.float32)    # Conv2d(C, C/2, 1).bias
    w2 = 0.2 * jax.random.normal(k3, (C, C2), jnp.float32)    # Conv2d(C/2, C, 1).weight
    b2 = 0.1 * jax.random.normal(k4, (C, 1), jnp.float32)     # Conv2d(C/2, C, 1).bias
    ws = 0.2 * jax.random.normal(k5, (2, 3, 3), jnp.float32)  # Conv2d(2, 1, 3).weight
    bs = 0.1 * jax.random.normal(k6, (1, 1), jnp.float32)     # Conv2d(2, 1, 3).bias

    out = cbam_pallas(x, w1, b1, w2, b2, ws, bs)
    out = jax.block_until_ready(out)

    ref = cbam_ref(x, w1, b1, w2, b2, ws, bs)
    assert out.shape == (B, C, H, W)
    assert jnp.allclose(out, ref, atol=1e-5, rtol=1e-5), float(jnp.max(jnp.abs(out - ref)))

    print("KERNEL_OK")
</pallas_src>

<mosaic_0001>
module attributes {stable_mosaic.version = 11 : i64} {
  func.func @kernel(%arg0: i32, %arg1: memref<1x4x256xf32, #tpu.memory_space<vmem>>, %arg2: memref<4x2xf32, #tpu.memory_space<vmem>>, %arg3: memref<1x2xf32, #tpu.memory_space<vmem>>, %arg4: memref<2x4xf32, #tpu.memory_space<vmem>>, %arg5: memref<1x4xf32, #tpu.memory_space<vmem>>, %arg6: memref<4x256xf32, #tpu.memory_space<vmem>>, %arg7: memref<18xf32, #tpu.memory_space<smem>>, %arg8: memref<1xf32, #tpu.memory_space<smem>>, %arg9: memref<1x4x256xf32, #tpu.memory_space<vmem>>) attributes {dimension_semantics = [#tpu.dimension_semantics<parallel>], iteration_bounds = array<i64: 2>, scalar_prefetch = 0 : i64, scratch_operands = 0 : i64, tpu.core_type = #tpu.core_type<tc>, window_params = [{transform_indices = @transform_0, window_bounds = array<i64: 1, 4, 256>}, {pipeline_mode = #tpu.pipeline_mode<synchronous>, transform_indices = @transform_1, window_bounds = array<i64: 4, 2>}, {pipeline_mode = #tpu.pipeline_mode<synchronous>, transform_indices = @transform_2, window_bounds = array<i64: 1, 2>}, {pipeline_mode = #tpu.pipeline_mode<synchronous>, transform_indices = @transform_3, window_bounds = array<i64: 2, 4>}, {pipeline_mode = #tpu.pipeline_mode<synchronous>, transform_indices = @transform_4, window_bounds = array<i64: 1, 4>}, {pipeline_mode = #tpu.pipeline_mode<synchronous>, transform_indices = @transform_5, window_bounds = array<i64: 4, 256>}, {transform_indices = @transform_6, window_bounds = array<i64: 18>}, {transform_indices = @transform_7, window_bounds = array<i64: 1>}, {transform_indices = @transform_8, window_bounds = array<i64: 1, 4, 256>}]} {
    %c0 = arith.constant 0 : index
    %c0_0 = arith.constant 0 : index
    %c0_1 = arith.constant 0 : index
    %0 = vector.load %arg1[%c0, %c0_0, %c0_1] : memref<1x4x256xf32, #tpu.memory_space<vmem>>, vector<1x4x256xf32>
    %cst = arith.constant dense<0xFF800000> : vector<1x4xf32>
    %1 = vector.multi_reduction <maximumf>, %0, %cst [2] : vector<1x4x256xf32> to vector<1x4xf32>
    %cst_2 = arith.constant dense<0.000000e+00> : vector<1x4xf32>
    %2 = vector.multi_reduction <add>, %0, %cst_2 [2] : vector<1x4x256xf32> to vector<1x4xf32>
    %cst_3 = arith.constant 2.560000e+02 : f32
    %3 = vector.broadcast %cst_3 : f32 to vector<1x4xf32>
    %4 = arith.divf %2, %3 : vector<1x4xf32>
    %5 = tpu.concatenate %1, %4 in 0 : vector<1x4xf32>, vector<1x4xf32> -> vector<2x4xf32>
    %c0_4 = arith.constant 0 : index
    %c0_5 = arith.constant 0 : index
    %6 = vector.load %arg2[%c0_4, %c0_5] : memref<4x2xf32, #tpu.memory_space<vmem>>, vector<4x2xf32>
    %cst_6 = arith.constant dense<0.000000e+00> : vector<2x2xf32>
    %7 = tpu.matmul %5, %6, %cst_6 {dimension_numbers = #tpu.dot_dimension_numbers<[1], [0], [0], [1], [0, 0, 1, 1], [], []>} : vector<2x4xf32>, vector<4x2xf32>, vector<2x2xf32> -> vector<2x2xf32>
    %c0_7 = arith.constant 0 : index
    %c0_8 = arith.constant 0 : index
    %8 = vector.load %arg3[%c0_7, %c0_8] : memref<1x2xf32, #tpu.memory_space<vmem>>, vector<1x2xf32>
    %9 = vector.broadcast %8 : vector<1x2xf32> to vector<2x2xf32>
    %10 = arith.addf %7, %9 : vector<2x2xf32>
    %c0_9 = arith.constant 0 : index
    %c0_10 = arith.constant 0 : index
    %11 = vector.load %arg4[%c0_9, %c0_10] : memref<2x4xf32, #tpu.memory_space<vmem>>, vector<2x4xf32>
    %cst_11 = arith.constant dense<0.000000e+00> : vector<2x4xf32>
    %12 = tpu.matmul %10, %11, %cst_11 {dimension_numbers = #tpu.dot_dimension_numbers<[1], [0], [0], [1], [0, 0, 1, 1], [], []>} : vector<2x2xf32>, vector<2x4xf32>, vector<2x4xf32> -> vector<2x4xf32>
    %c0_12 = arith.constant 0 : index
    %c0_13 = arith.constant 0 : index
    %13 = vector.load %arg5[%c0_12, %c0_13] : memref<1x4xf32, #tpu.memory_space<vmem>>, vector<1x4xf32>
    %14 = vector.broadcast %13 : vector<1x4xf32> to vector<2x4xf32>
    %15 = arith.addf %12, %14 : vector<2x4xf32>
    %16 = vector.extract_strided_slice %15 {offsets = [0, 0], sizes = [1, 4], strides = [1, 1]} : vector<2x4xf32> to vector<1x4xf32>
    %17 = vector.extract_strided_slice %15 {offsets = [1, 0], sizes = [1, 4], strides = [1, 1]} : vector<2x4xf32> to vector<1x4xf32>
    %18 = arith.addf %16, %17 : vector<1x4xf32>
    %19 = arith.negf %18 : vector<1x4xf32>
    %20 = math.exp %19 : vector<1x4xf32>
    %cst_14 = arith.constant 1.000000e+00 : f32
    %21 = vector.broadcast %cst_14 : f32 to vector<1x4xf32>
    %22 = arith.addf %21, %20 : vector<1x4xf32>
    %23 = arith.divf %21, %22 : vector<1x4xf32>
    %cst_15 = arith.constant dense<0xFF800000> : vector<1x256xf32>
    %24 = vector.multi_reduction <maximumf>, %0, %cst_15 [1] : vector<1x4x256xf32> to vector<1x256xf32>
    %cst_16 = arith.constant dense<0.000000e+00> : vector<1x256xf32>
    %25 = vector.multi_reduction <add>, %0, %cst_16 [1] : vector<1x4x256xf32> to vector<1x256xf32>
    %cst_17 = arith.constant 4.000000e+00 : f32
    %26 = vector.broadcast %cst_17 : f32 to vector<1x256xf32>
    %27 = arith.divf %25, %26 : vector<1x256xf32>
    %c0_18 = arith.constant 0 : index
    %c0_19 = arith.constant 0 : index
    %28 = vector.load %arg6[%c0_18, %c0_19] : memref<4x256xf32, #tpu.memory_space<vmem>>, vector<4x256xf32>
    %29 = vector.extract_strided_slice %28 {offsets = [0, 0], sizes = [1, 256], strides = [1, 1]} : vector<4x256xf32> to vector<1x256xf32>
    %30 = vector.extract_strided_slice %28 {offsets = [1, 0], sizes = [1, 256], strides = [1, 1]} : vector<4x256xf32> to vector<1x256xf32>
    %31 = vector.extract_strided_slice %28 {offsets = [2, 0], sizes = [1, 256], strides = [1, 1]} : vector<4x256xf32> to vector<1x256xf32>
    %32 = vector.extract_strided_slice %28 {offsets = [3, 0], sizes = [1, 256], strides = [1, 1]} : vector<4x256xf32> to vector<1x256xf32>
    %c17_i32 = arith.constant 17 : i32
    %33 = tpu.dynamic_rotate %24 by %c17_i32 dim 1 : vector<1x256xf32>, i32 -> vector<1x256xf32>
    %c17_i32_20 = arith.constant 17 : i32
    %34 = tpu.dynamic_rotate %27 by %c17_i32_20 dim 1 : vector<1x256xf32>, i32 -> vector<1x256xf32>
    %c0_21 = arith.constant 0 : index
    %35 = memref.load %arg7[%c0_21] : memref<18xf32, #tpu.memory_space<smem>>
    %36 = vector.broadcast %35 : f32 to vector<1x256xf32>
    %37 = arith.mulf %36, %33 : vector<1x256xf32>
    %c9 = arith.constant 9 : index
    %38 = memref.load %arg7[%c9] : memref<18xf32, #tpu.memory_space<smem>>
    %39 = vector.broadcast %38 : f32 to vector<1x256xf32>
    %40 = arith.mulf %39, %34 : vector<1x256xf32>
    %41 = arith.addf %37, %40 : vector<1x256xf32>
    %42 = arith.mulf %29, %31 : vector<1x256xf32>
    %43 = arith.mulf %42, %41 : vector<1x256xf32>
    %c16_i32 = arith.constant 16 : i32
    %44 = tpu.dynamic_rotate %24 by %c16_i32 dim 1 : vector<1x256xf32>, i32 -> vector<1x256xf32>
    %c16_i32_22 = arith.constant 16 : i32
    %45 = tpu.dynamic_rotate %27 by %c16_i32_22 dim 1 : vector<1x256xf32>, i32 -> vector<1x256xf32>
    %c1 = arith.constant 1 : index
    %46 = memref.load %arg7[%c1] : memref<18xf32, #tpu.memory_space<smem>>
    %47 = vector.broadcast %46 : f32 to vector<1x256xf32>
    %48 = arith.mulf %47, %44 : vector<1x256xf32>
    %c10 = arith.constant 10 : index
    %49 = memref.load %arg7[%c10] : memref<18xf32, #tpu.memory_space<smem>>
    %50 = vector.broadcast %49 : f32 to vector<1x256xf32>
    %51 = arith.mulf %50, %45 : vector<1x256xf32>
    %52 = arith.addf %48, %51 : vector<1x256xf32>
    %53 = arith.mulf %29, %52 : vector<1x256xf32>
    %54 = arith.addf %43, %53 : vector<1x256xf32>
    %c15_i32 = arith.constant 15 : i32
    %55 = tpu.dynamic_rotate %24 by %c15_i32 dim 1 : vector<1x256xf32>, i32 -> vector<1x256xf32>
    %c15_i32_23 = arith.constant 15 : i32
    %56 = tpu.dynamic_rotate %27 by %c15_i32_23 dim 1 : vector<1x256xf32>, i32 -> vector<1x256xf32>
    %c2 = arith.constant 2 : index
    %57 = memref.load %arg7[%c2] : memref<18xf32, #tpu.memory_space<smem>>
    %58 = vector.broadcast %57 : f32 to vector<1x256xf32>
    %59 = arith.mulf %58, %55 : vector<1x256xf32>
    %c11 = arith.constant 11 : index
    %60 = memref.load %arg7[%c11] : memref<18xf32, #tpu.memory_space<smem>>
    %61 = vector.broadcast %60 : f32 to vector<1x256xf32>
    %62 = arith.mulf %61, %56 : vector<1x256xf32>
    %63 = arith.addf %59, %62 : vector<1x256xf32>
    %64 = arith.mulf %29, %32 : vector<1x256xf32>
    %65 = arith.mulf %64, %63 : vector<1x256xf32>
    %66 = arith.addf %54, %65 : vector<1x256xf32>
    %c1_i32 = arith.constant 1 : i32
    %67 = tpu.dynamic_rotate %24 by %c1_i32 dim 1 : vector<1x256xf32>, i32 -> vector<1x256xf32>
    %c1_i32_24 = arith.constant 1 : i32
    %68 = tpu.dynamic_rotate %27 by %c1_i32_24 dim 1 : vector<1x256xf32>, i32 -> vector<1x256xf32>
    %c3 = arith.constant 3 : index
    %69 = memref.load %arg7[%c3] : memref<18xf32, #tpu.memory_space<smem>>
    %70 = vector.broadcast %69 : f32 to vector<1x256xf32>
    %71 = arith.mulf %70, %67 : vector<1x256xf32>
    %c12 = arith.constant 12 : index
    %72 = memref.load %arg7[%c12] : memref<18xf32, #tpu.memory_space<smem>>
    %73 = vector.broadcast %72 : f32 to vector<1x256xf32>
    %74 = arith.mulf %73, %68 : vector<1x256xf32>
    %75 = arith.addf %71, %74 : vector<1x256xf32>
    %76 = arith.mulf %31, %75 : vector<1x256xf32>
    %77 = arith.addf %66, %76 : vector<1x256xf32>
    %c4 = arith.constant 4 : index
    %78 = memref.load %arg7[%c4] : memref<18xf32, #tpu.memory_space<smem>>
    %79 = vector.broadcast %78 : f32 to vector<1x256xf32>
    %80 = arith.mulf %79, %24 : vector<1x256xf32>
    %c13 = arith.constant 13 : index
    %81 = memref.load %arg7[%c13] : memref<18xf32, #tpu.memory_space<smem>>
    %82 = vector.broadcast %81 : f32 to vector<1x256xf32>
    %83 = arith.mulf %82, %27 : vector<1x256xf32>
    %84 = arith.addf %80, %83 : vector<1x256xf32>
    %85 = arith.addf %77, %84 : vector<1x256xf32>
    %c255_i32 = arith.constant 255 : i32
    %86 = tpu.dynamic_rotate %24 by %c255_i32 dim 1 : vector<1x256xf32>, i32 -> vector<1x256xf32>
    %c255_i32_25 = arith.constant 255 : i32
    %87 = tpu.dynamic_rotate %27 by %c255_i32_25 dim 1 : vector<1x256xf32>, i32 -> vector<1x256xf32>
    %c5 = arith.constant 5 : index
    %88 = memref.load %arg7[%c5] : memref<18xf32, #tpu.memory_space<smem>>
    %89 = vector.broadcast %88 : f32 to vector<1x256xf32>
    %90 = arith.mulf %89, %86 : vector<1x256xf32>
    %c14 = arith.constant 14 : index
    %91 = memref.load %arg7[%c14] : memref<18xf32, #tpu.memory_space<smem>>
    %92 = vector.broadcast %91 : f32 to vector<1x256xf32>
    %93 = arith.mulf %92, %87 : vector<1x256xf32>
    %94 = arith.addf %90, %93 : vector<1x256xf32>
    %95 = arith.mulf %32, %94 : vector<1x256xf32>
    %96 = arith.addf %85, %95 : vector<1x256xf32>
    %c241_i32 = arith.constant 241 : i32
    %97 = tpu.dynamic_rotate %24 by %c241_i32 dim 1 : vector<1x256xf32>, i32 -> vector<1x256xf32>
    %c241_i32_26 = arith.constant 241 : i32
    %98 = tpu.dynamic_rotate %27 by %c241_i32_26 dim 1 : vector<1x256xf32>, i32 -> vector<1x256xf32>
    %c6 = arith.constant 6 : index
    %99 = memref.load %arg7[%c6] : memref<18xf32, #tpu.memory_space<smem>>
    %100 = vector.broadcast %99 : f32 to vector<1x256xf32>
    %101 = arith.mulf %100, %97 : vector<1x256xf32>
    %c15 = arith.constant 15 : index
    %102 = memref.load %arg7[%c15] : memref<18xf32, #tpu.memory_space<smem>>
    %103 = vector.broadcast %102 : f32 to vector<1x256xf32>
    %104 = arith.mulf %103, %98 : vector<1x256xf32>
    %105 = arith.addf %101, %104 : vector<1x256xf32>
    %106 = arith.mulf %30, %31 : vector<1x256xf32>
    %107 = arith.mulf %106, %105 : vector<1x256xf32>
    %108 = arith.addf %96, %107 : vector<1x256xf32>
    %c240_i32 = arith.constant 240 : i32
    %109 = tpu.dynamic_rotate %24 by %c240_i32 dim 1 : vector<1x256xf32>, i32 -> vector<1x256xf32>
    %c240_i32_27 = arith.constant 240 : i32
    %110 = tpu.dynamic_rotate %27 by %c240_i32_27 dim 1 : vector<1x256xf32>, i32 -> vector<1x256xf32>
    %c7 = arith.constant 7 : index
    %111 = memref.load %arg7[%c7] : memref<18xf32, #tpu.memory_space<smem>>
    %112 = vector.broadcast %111 : f32 to vector<1x256xf32>
    %113 = arith.mulf %112, %109 : vector<1x256xf32>
    %c16 = arith.constant 16 : index
    %114 = memref.load %arg7[%c16] : memref<18xf32, #tpu.memory_space<smem>>
    %115 = vector.broadcast %114 : f32 to vector<1x256xf32>
    %116 = arith.mulf %115, %110 : vector<1x256xf32>
    %117 = arith.addf %113, %116 : vector<1x256xf32>
    %118 = arith.mulf %30, %117 : vector<1x256xf32>
    %119 = arith.addf %108, %118 : vector<1x256xf32>
    %c239_i32 = arith.constant 239 : i32
    %120 = tpu.dynamic_rotate %24 by %c239_i32 dim 1 : vector<1x256xf32>, i32 -> vector<1x256xf32>
    %c239_i32_28 = arith.constant 239 : i32
    %121 = tpu.dynamic_rotate %27 by %c239_i32_28 dim 1 : vector<1x256xf32>, i32 -> vector<1x256xf32>
    %c8 = arith.constant 8 : index
    %122 = memref.load %arg7[%c8] : memref<18xf32, #tpu.memory_space<smem>>
    %123 = vector.broadcast %122 : f32 to vector<1x256xf32>
    %124 = arith.mulf %123, %120 : vector<1x256xf32>
    %c17 = arith.constant 17 : index
    %125 = memref.load %arg7[%c17] : memref<18xf32, #tpu.memory_space<smem>>
    %126 = vector.broadcast %125 : f32 to vector<1x256xf32>
    %127 = arith.mulf %126, %121 : vector<1x256xf32>
    %128 = arith.addf %124, %127 : vector<1x256xf32>
    %129 = arith.mulf %30, %32 : vector<1x256xf32>
    %130 = arith.mulf %129, %128 : vector<1x256xf32>
    %131 = arith.addf %119, %130 : vector<1x256xf32>
    %c0_29 = arith.constant 0 : index
    %132 = memref.load %arg8[%c0_29] : memref<1xf32, #tpu.memory_space<smem>>
    %133 = vector.broadcast %132 : f32 to vector<1x256xf32>
    %134 = arith.addf %131, %133 : vector<1x256xf32>
    %135 = arith.negf %134 : vector<1x256xf32>
    %136 = math.exp %135 : vector<1x256xf32>
    %cst_30 = arith.constant 1.000000e+00 : f32
    %137 = vector.broadcast %cst_30 : f32 to vector<1x256xf32>
    %138 = arith.addf %137, %136 : vector<1x256xf32>
    %139 = arith.divf %137, %138 : vector<1x256xf32>
    %140 = vector.shape_cast %23 : vector<1x4xf32> to vector<1x4x1xf32>
    %141 = vector.shape_cast %139 : vector<1x256xf32> to vector<1x1x256xf32>
    %142 = vector.broadcast %141 : vector<1x1x256xf32> to vector<1x4x256xf32>
    %143 = arith.mulf %142, %0 : vector<1x4x256xf32>
    %144 = vector.broadcast %140 : vector<1x4x1xf32> to vector<1x4x256xf32>
    %145 = arith.mulf %144, %143 : vector<1x4x256xf32>
    %c0_31 = arith.constant 0 : index
    %c0_32 = arith.constant 0 : index
    %c0_33 = arith.constant 0 : index
    %146 = vector.load %arg9[%c0_31, %c0_32, %c0_33] : memref<1x4x256xf32, #tpu.memory_space<vmem>>, vector<1x4x256xf32>
    tpu.vector_store %arg9[%c0_31, %c0_32, %c0_33], %145 {strides = array<i32>} : memref<1x4x256xf32, #tpu.memory_space<vmem>>, vector<1x4x256xf32>,
    return
  }
  func.func @transform_0(%arg0: i32) -> (i32, i32, i32) {
    %c0_i32 = arith.constant 0 : i32
    %c0_i32_0 = arith.constant 0 : i32
    %c0_i32_1 = arith.constant 0 : i32
    return %arg0, %c0_i32, %c0_i32_0 : i32, i32, i32
  }
  func.func @transform_1(%arg0: i32) -> (i32, i32) {
    %c0_i32 = arith.constant 0 : i32
    %c0_i32_0 = arith.constant 0 : i32
    %c0_i32_1 = arith.constant 0 : i32
    return %c0_i32, %c0_i32_0 : i32, i32
  }
  func.func @transform_2(%arg0: i32) -> (i32, i32) {
    %c0_i32 = arith.constant 0 : i32
    %c0_i32_0 = arith.constant 0 : i32
    %c0_i32_1 = arith.constant 0 : i32
    return %c0_i32, %c0_i32_0 : i32, i32
  }
  func.func @transform_3(%arg0: i32) -> (i32, i32) {
    %c0_i32 = arith.constant 0 : i32
    %c0_i32_0 = arith.constant 0 : i32
    %c0_i32_1 = arith.constant 0 : i32
    return %c0_i32, %c0_i32_0 : i32, i32
  }
  func.func @transform_4(%arg0: i32) -> (i32, i32) {
    %c0_i32 = arith.constant 0 : i32
    %c0_i32_0 = arith.constant 0 : i32
    %c0_i32_1 = arith.constant 0 : i32
    return %c0_i32, %c0_i32_0 : i32, i32
  }
  func.func @transform_5(%arg0: i32) -> (i32, i32) {
    %c0_i32 = arith.constant 0 : i32
    %c0_i32_0 = arith.constant 0 : i32
    %c0_i32_1 = arith.constant 0 : i32
    return %c0_i32, %c0_i32_0 : i32, i32
  }
  func.func @transform_6(%arg0: i32) -> i32 {
    %c0_i32 = arith.constant 0 : i32
    %c0_i32_0 = arith.constant 0 : i32
    return %c0_i32 : i32
  }
  func.func @transform_7(%arg0: i32) -> i32 {
    %c0_i32 = arith.constant 0 : i32
    %c0_i32_0 = arith.constant 0 : i32
    return %c0_i32 : i32
  }
  func.func @transform_8(%arg0: i32) -> (i32, i32, i32) {
    %c0_i32 = arith.constant 0 : i32
    %c0_i32_0 = arith.constant 0 : i32
    %c0_i32_1 = arith.constant 0 : i32
    return %arg0, %c0_i32, %c0_i32_0 : i32, i32, i32
  }
}

</mosaic_0001>

<llo_original>
// kernel: tpu_custom_call.1
$region0: #{tpu_custom_call.1}
  #allocation0 [shape = 'u32[]', space=smem, size = 0x4, offset = 0x4, fixed_abs, tag = 'smem constant byte address 0x4 - core index']
  #allocation1 [shape = 'u32[72,128]{1,0:T(1,128)}', space=vmem, size = 0x9000, scoped, tag = 'internal scratch']
  #allocation2 [shape = 'f32[1]{0:T(128)S(6)}', space=smem, size = 0x200, scoped, tag = 'scoped memory for tpu_custom_call.1']
  %s0 = inlined_call_operand.hbm [shape: f32[2,4,256], index: 0, kind: input, shape index: {}]
  %s1 = inlined_call_operand.vmem [shape: f32[4,2], index: 1, kind: input, shape index: {}]
  %s2 = inlined_call_operand.vmem [shape: f32[1,2], index: 2, kind: input, shape index: {}]
  %s3 = inlined_call_operand.vmem [shape: f32[2,4], index: 3, kind: input, shape index: {}]
  %s4 = inlined_call_operand.vmem [shape: f32[1,4], index: 4, kind: input, shape index: {}]
  %s5 = inlined_call_operand.hbm [shape: f32[4,256], index: 5, kind: input, shape index: {}]
  %s6 = inlined_call_operand.vmem [shape: f32[18], index: 6, kind: input, shape index: {}]
  %s7 = inlined_call_operand.<no memory space> [shape: f32[1], index: 7, kind: input, shape index: {}]
  %s8 = inlined_call_operand.hbm [shape: f32[2,4,256], index: 8, kind: output, shape index: {}]
  %s9 = sld [smem:[#allocation0]]
  $region77: #{tpu_custom_call.1} parent=0
    _
  %s11 = ssub.s32 1, %s9
  %s12 = scalar_select 0, %s11, %s9
  %13 = sst [smem:[#allocation2]] %s7
  $region1: #{tpu_custom_call.1} parent=0
    #allocation3 [shape = 'u8[8192]{0}', space=vmem, size = 0x2000, scoped, tag = 'input window, operand 0']
    #allocation4 [shape = 's32[2]{0}', space=sflag, size = 0x8, scoped, tag = 'scoped memory for tpu_custom_call.1']
    #allocation5 [shape = 's32[2]{0}', space=sflag, size = 0x8, scoped, tag = 'scoped memory for tpu_custom_call.1']
    #allocation6 [shape = 's32[2]{0}', space=sflag, size = 0x8, scoped, tag = 'scoped memory for tpu_custom_call.1']
    #allocation7 [shape = 'u8[4096]{0}', space=vmem, size = 0x1000, scoped, tag = 'input window, operand 5, single buffered']
    #allocation8 [shape = 's32[1]{0}', space=sflag, size = 0x4, scoped, tag = 'scoped memory for tpu_custom_call.1']
    #allocation9 [shape = 'u8[512]{0}', space=smem, size = 0x200, scoped, tag = 'input window, operand 6, single buffered']
    #allocation10 [shape = 'u8[8192]{0}', space=vmem, size = 0x2000, scoped, tag = 'output window, operand 0']
    %14 = vsyncpa [#allocation4], 0
    %s15 = scalar_lea.sflag [#allocation4], 1
    %16 = vsyncpa %s15, 0
    %17 = vsyncpa [#allocation8], 0
    %18 = vsyncpa [#allocation6], 0
    %19 = vsyncpa [#allocation5], 0
    %s20 = scalar_lea.sflag [#allocation5], 1
    %21 = vsyncpa %s20, 0
    loop: start=0, step=1, limit=4
    $region2: #{tpu_custom_call.1} parent=1 // loop_pre_header
      _
    $region3: #{tpu_custom_call.1} parent=1 // loop_header
      %s23 = sphi 0, %s27
      %p24 = scmp.ge.s32.totalorder %s23, 4
      %s33 = sphi 0, %s35
      %s36 = sphi 0, %s33
      %s37 = sphi 0, %s36
      %s53 = sphi 0, %s37
      %s57 = sphi 0, %s57
      %s59 = sphi 0, %s57
      %s60 = sphi 0, %s59
      %s74 = sphi 0, %s60
      %s78 = sphi 0, %s78
      %s80 = sphi 0, %s78
      %s81 = sphi 0, %s80
      %s95 = sphi 0, %s81
      %s99 = sphi 0, %s99
      %s101 = sphi 0, %s99
      %s102 = sphi 0, %s101
      %s116 = sphi 0, %s102
      %s120 = sphi 0, %s120
      %s122 = sphi 0, %s120
      %s123 = sphi 0, %s122
      %s137 = sphi 0, %s123
      %s141 = sphi 0, %s141
      %s143 = sphi 0, %s141
      %s144 = sphi 0, %s143
      %s158 = sphi 0, %s144
      %s162 = sphi 0, %s162
      %s164 = sphi 0, %s162
      %s165 = sphi 0, %s164
      %s179 = sphi 0, %s165
      %s183 = sphi 0, %s183
      %s185 = sphi 0, %s183
      %s186 = sphi 0, %s185
      %s200 = sphi 0, %s186
      %s206 = sphi 0, %s208
      %s209 = sphi 0, %s206
      %s210 = sphi 0, %s209
      %s226 = sphi 0, %s210
    $region4: #{tpu_custom_call.1} parent=1 // loop_header_branch
      %26 = sbr.rel (%p24) target = $region8
    $region5: #{tpu_custom_call.1} parent=1 // loop_body
      %s28 = ssub.s32 %s23, 1
      %s29 = ssub.s32 %s23, 2
      %s30 = sadd.s32 %s23, 1
      %s31 = ssub.s32 %s23, %s30
      %p32 = scmp.eq.s32.totalorder %s31, 0
      %s34 = sadd.s32 %s33, 1
      %s35 = scalar_select %p32, %s33, %s34
      %p38 = pneg %p32
      %p39 = scmp.eq.s32.totalorder %s23, 1
      %p40 = por %p38, %p39
      %p41 = scmp.ne.s32.totalorder %s33, %s36
      %p42 = scmp.eq.s32.totalorder %s23, 0
      %p43 = por %p41, %p42
      %p44 = scmp.ne.s32.totalorder %s33, %s36
      %p45 = scmp.eq.s32.totalorder %s28, 1
      %p46 = por %p44, %p45
      %p47 = scmp.ne.s32.totalorder %s36, %s37
      %p48 = scmp.eq.s32.totalorder %s28, 0
      %p49 = por %p47, %p48
      %p50 = scmp.ne.s32.totalorder %s36, %s37
      %p51 = scmp.eq.s32.totalorder %s29, 1
      %p52 = por %p50, %p51
      %p54 = scmp.ne.s32.totalorder %s37, %s53
      %p55 = scmp.eq.s32.totalorder %s29, 0
      %p56 = por %p54, %p55
      %s58 = sadd.s32 %s57, 1
      %p61 = scmp.eq.s32.totalorder %s23, 1
      %p62 = scmp.ne.s32.totalorder %s57, %s59
      %p63 = scmp.eq.s32.totalorder %s23, 0
      %p64 = por %p62, %p63
      %p65 = scmp.ne.s32.totalorder %s57, %s59
      %p66 = scmp.eq.s32.totalorder %s28, 1
      %p67 = por %p65, %p66
      %p68 = scmp.ne.s32.totalorder %s59, %s60
      %p69 = scmp.eq.s32.totalorder %s28, 0
      %p70 = por %p68, %p69
      %p71 = scmp.ne.s32.totalorder %s59, %s60
      %p72 = scmp.eq.s32.totalorder %s29, 1
      %p73 = por %p71, %p72
      %p75 = scmp.ne.s32.totalorder %s60, %s74
      %p76 = scmp.eq.s32.totalorder %s29, 0
      %p77 = por %p75, %p76
      %s79 = sadd.s32 %s78, 1
      %p82 = scmp.eq.s32.totalorder %s23, 1
      %p83 = scmp.ne.s32.totalorder %s78, %s80
      %p84 = scmp.eq.s32.totalorder %s23, 0
      %p85 = por %p83, %p84
      %p86 = scmp.ne.s32.totalorder %s78, %s80
      %p87 = scmp.eq.s32.totalorder %s28, 1
      %p88 = por %p86, %p87
      %p89 = scmp.ne.s32.totalorder %s80, %s81
      %p90 = scmp.eq.s32.totalorder %s28, 0
      %p91 = por %p89, %p90
      %p92 = scmp.ne.s32.totalorder %s80, %s81
      %p93 = scmp.eq.s32.totalorder %s29, 1
      %p94 = por %p92, %p93
      %p96 = scmp.ne.s32.totalorder %s81, %s95
      %p97 = scmp.eq.s32.totalorder %s29, 0
      %p98 = por %p96, %p97
      %s100 = sadd.s32 %s99, 1
      %p103 = scmp.eq.s32.totalorder %s23, 1
      %p104 = scmp.ne.s32.totalorder %s99, %s101
      %p105 = scmp.eq.s32.totalorder %s23, 0
      %p106 = por %p104, %p105
      %p107 = scmp.ne.s32.totalorder %s99, %s101
      %p108 = scmp.eq.s32.totalorder %s28, 1
      %p109 = por %p107, %p108
      %p110 = scmp.ne.s32.totalorder %s101, %s102
      %p111 = scmp.eq.s32.totalorder %s28, 0
      %p112 = por %p110, %p111
      %p113 = scmp.ne.s32.totalorder %s101, %s102
      %p114 = scmp.eq.s32.totalorder %s29, 1
      %p115 = por %p113, %p114
      %p117 = scmp.ne.s32.totalorder %s102, %s116
      %p118 = scmp.eq.s32.totalorder %s29, 0
      %p119 = por %p117, %p118
      %s121 = sadd.s32 %s120, 1
      %p124 = scmp.eq.s32.totalorder %s23, 1
      %p125 = scmp.ne.s32.totalorder %s120, %s122
      %p126 = scmp.eq.s32.totalorder %s23, 0
      %p127 = por %p125, %p126
      %p128 = scmp.ne.s32.totalorder %s120, %s122
      %p129 = scmp.eq.s32.totalorder %s28, 1
      %p130 = por %p128, %p129
      %p131 = scmp.ne.s32.totalorder %s122, %s123
      %p132 = scmp.eq.s32.totalorder %s28, 0
      %p133 = por %p131, %p132
      %p134 = scmp.ne.s32.totalorder %s122, %s123
      %p135 = scmp.eq.s32.totalorder %s29, 1
      %p136 = por %p134, %p135
      %p138 = scmp.ne.s32.totalorder %s123, %s137
      %p139 = scmp.eq.s32.totalorder %s29, 0
      %p140 = por %p138, %p139
      %s142 = sadd.s32 %s141, 1
      %p145 = scmp.eq.s32.totalorder %s23, 1
      %p146 = scmp.ne.s32.totalorder %s141, %s143
      %p147 = scmp.eq.s32.totalorder %s23, 0
      %p148 = por %p146, %p147
      %p149 = scmp.ne.s32.totalorder %s141, %s143
      %p150 = scmp.eq.s32.totalorder %s28, 1
      %p151 = por %p149, %p150
      %p152 = scmp.ne.s32.totalorder %s143, %s144
      %p153 = scmp.eq.s32.totalorder %s28, 0
      %p154 = por %p152, %p153
      %p155 = scmp.ne.s32.totalorder %s143, %s144
      %p156 = scmp.eq.s32.totalorder %s29, 1
      %p157 = por %p155, %p156
      %p159 = scmp.ne.s32.totalorder %s144, %s158
      %p160 = scmp.eq.s32.totalorder %s29, 0
      %p161 = por %p159, %p160
      %s163 = sadd.s32 %s162, 1
      %p166 = scmp.eq.s32.totalorder %s23, 1
      %p167 = scmp.ne.s32.totalorder %s162, %s164
      %p168 = scmp.eq.s32.totalorder %s23, 0
      %p169 = por %p167, %p168
      %p170 = scmp.ne.s32.totalorder %s162, %s164
      %p171 = scmp.eq.s32.totalorder %s28, 1
      %p172 = por %p170, %p171
      %p173 = scmp.ne.s32.totalorder %s164, %s165
      %p174 = scmp.eq.s32.totalorder %s28, 0
      %p175 = por %p173, %p174
      %p176 = scmp.ne.s32.totalorder %s164, %s165
      %p177 = scmp.eq.s32.totalorder %s29, 1
      %p178 = por %p176, %p177
      %p180 = scmp.ne.s32.totalorder %s165, %s179
      %p181 = scmp.eq.s32.totalorder %s29, 0
      %p182 = por %p180, %p181
      %s184 = sadd.s32 %s183, 1
      %p187 = scmp.eq.s32.totalorder %s23, 1
      %p188 = scmp.ne.s32.totalorder %s183, %s185
      %p189 = scmp.eq.s32.totalorder %s23, 0
      %p190 = por %p188, %p189
      %p191 = scmp.ne.s32.totalorder %s183, %s185
      %p192 = scmp.eq.s32.totalorder %s28, 1
      %p193 = por %p191, %p192
      %p194 = scmp.ne.s32.totalorder %s185, %s186
      %p195 = scmp.eq.s32.totalorder %s28, 0
      %p196 = por %p194, %p195
      %p197 = scmp.ne.s32.totalorder %s185, %s186
      %p198 = scmp.eq.s32.totalorder %s29, 1
      %p199 = por %p197, %p198
      %p201 = scmp.ne.s32.totalorder %s186, %s200
      %p202 = scmp.eq.s32.totalorder %s29, 0
      %p203 = por %p201, %p202
      %s204 = ssub.s32 %s23, %s30
      %p205 = scmp.eq.s32.totalorder %s204, 0
      %s207 = sadd.s32 %s206, 1
      %s208 = scalar_select %p205, %s206, %s207
      %p211 = pneg %p205
      %p212 = scmp.eq.s32.totalorder %s23, 1
      %p213 = por %p211, %p212
      %p214 = scmp.ne.s32.totalorder %s206, %s209
      %p215 = scmp.eq.s32.totalorder %s23, 0
      %p216 = por %p214, %p215
      %p217 = scmp.ne.s32.totalorder %s206, %s209
      %p218 = scmp.eq.s32.totalorder %s28, 1
      %p219 = por %p217, %p218
      %p220 = scmp.ne.s32.totalorder %s209, %s210
      %p221 = scmp.eq.s32.totalorder %s28, 0
      %p222 = por %p220, %p221
      %p223 = scmp.ne.s32.totalorder %s209, %s210
      %p224 = scmp.eq.s32.totalorder %s29, 1
      %p225 = por %p223, %p224
      %p227 = scmp.ne.s32.totalorder %s210, %s226
      %p228 = scmp.eq.s32.totalorder %s29, 0
      %p229 = por %p227, %p228
      %p230 = scmp.le.s32.totalorder 1, %s23
      %p231 = scmp.lt.s32.totalorder %s23, 3
      %p232 = pnand %p230, %p231
      %p233 = pneg %p232
      // Predicated region
      $region9: #{tpu_custom_call.1} parent=5 // pred_check
        _
      $region10: #{tpu_custom_call.1} parent=5 // pred_check_branch
        %235 = sbr.rel (%p232) target = $region12
      $region11: #{tpu_custom_call.1} parent=5 // pred_region
        %s236 = ssub.s32 %s23, 1
        // Predicated region
        $region13: #{tpu_custom_call.1} parent=11 // pred_check
          %p237 = pneg %p70
        $region14: #{tpu_custom_call.1} parent=11 // pred_check_branch
          %239 = sbr.rel (%p237) target = $region16
        $region15: #{tpu_custom_call.1} parent=11 // pred_region
          _
        $region16: #{tpu_custom_call.1} parent=11 // pred_fallthru
          _
        // Predicated region
        $region17: #{tpu_custom_call.1} parent=11 // pred_check
          %p240 = pneg %p91
        $region18: #{tpu_custom_call.1} parent=11 // pred_check_branch
          %242 = sbr.rel (%p240) target = $region20
        $region19: #{tpu_custom_call.1} parent=11 // pred_region
          _
        $region20: #{tpu_custom_call.1} parent=11 // pred_fallthru
          _
        // Predicated region
        $region21: #{tpu_custom_call.1} parent=11 // pred_check
          %p243 = pneg %p112
        $region22: #{tpu_custom_call.1} parent=11 // pred_check_branch
          %245 = sbr.rel (%p243) target = $region24
        $region23: #{tpu_custom_call.1} parent=11 // pred_region
          _
        $region24: #{tpu_custom_call.1} parent=11 // pred_fallthru
          _
        // Predicated region
        $region25: #{tpu_custom_call.1} parent=11 // pred_check
          %p246 = pneg %p133
        $region26: #{tpu_custom_call.1} parent=11 // pred_check_branch
          %248 = sbr.rel (%p246) target = $region28
        $region27: #{tpu_custom_call.1} parent=11 // pred_region
          _
        $region28: #{tpu_custom_call.1} parent=11 // pred_fallthru
          _
        // Predicated region
        $region29: #{tpu_custom_call.1} parent=11 // pred_check
          %p249 = pneg %p154
        $region30: #{tpu_custom_call.1} parent=11 // pred_check_branch
          %251 = sbr.rel (%p249) target = $region32
        $region31: #{tpu_custom_call.1} parent=11 // pred_region
          %253 = vsyncadd [#allocation8], 0
          %s255 = sshll.u32 %s5, 4
          %s256 = int_to_ptr.hbm [resolvable:$true] %s255
          %s257 = sshll.u32 [#allocation7], 4
          %s258 = int_to_ptr.vmem [resolvable:$true] %s257
          %260 = dma.hbm_to_vmem [thread:$0]  %s256, 128, %s258, [#allocation8]
        $region32: #{tpu_custom_call.1} parent=11 // pred_fallthru
          _
        // Predicated region
        $region33: #{tpu_custom_call.1} parent=11 // pred_check
          %p261 = pneg %p175
        $region34: #{tpu_custom_call.1} parent=11 // pred_check_branch
          %263 = sbr.rel (%p261) target = $region36
        $region35: #{tpu_custom_call.1} parent=11 // pred_region
          %265 = vsyncadd [#allocation6], 0
          %s267 = sshll.u32 %s6, 4
          %s268 = int_to_ptr.vmem [resolvable:$true] %s267
          %270 = dma.vmem_to_smem %s268, 16, [#allocation9], [#allocation6]
        $region36: #{tpu_custom_call.1} parent=11 // pred_fallthru
          _
        // Predicated region
        $region37: #{tpu_custom_call.1} parent=11 // pred_check
          %p271 = pneg %p196
        $region38: #{tpu_custom_call.1} parent=11 // pred_check_branch
          %273 = sbr.rel (%p271) target = $region40
        $region39: #{tpu_custom_call.1} parent=11 // pred_region
          _
        $region40: #{tpu_custom_call.1} parent=11 // pred_fallthru
          _
      $region12: #{tpu_custom_call.1} parent=5 // pred_fallthru
        _
      %p274 = scmp.lt.s32.totalorder %s23, 2
      // Predicated region
      $region41: #{tpu_custom_call.1} parent=5 // pred_check
        %p275 = pneg %p274
      $region42: #{tpu_custom_call.1} parent=5 // pred_check_branch
        %277 = sbr.rel (%p275) target = $region44
      $region43: #{tpu_custom_call.1} parent=5 // pred_region
        // Predicated region
        $region45: #{tpu_custom_call.1} parent=43 // pred_check
          %p278 = pneg %p43
        $region46: #{tpu_custom_call.1} parent=43 // pred_check_branch
          %280 = sbr.rel (%p278) target = $region48
        $region47: #{tpu_custom_call.1} parent=43 // pred_region
          %s281 = sand.u32 %s33, 1
          %s282 = scalar_lea.sflag [#allocation4], %s281
          %s283 = sand.u32 %s33, 1
          %s284 = smul.addr %s283, 8
          %s285 = scalar_lea.vmem [#allocation3], %s284
          %287 = vsyncadd %s282, 0
          %s288 = smul.addr %s23, 2
          %s289 = smul.addr %s288, 4
          %s290 = scalar_lea.hbm %s0, %s289
          %s292 = sshll.u32 %s290, 4
          %s293 = int_to_ptr.hbm [resolvable:$true] %s292
          %s294 = sshll.u32 %s285, 4
          %s295 = int_to_ptr.vmem [resolvable:$true] %s294
          %297 = dma.hbm_to_vmem [thread:$0]  %s293, 128, %s295, %s282
        $region48: #{tpu_custom_call.1} parent=43 // pred_fallthru
          _
      $region44: #{tpu_custom_call.1} parent=5 // pred_fallthru
        _
      %p298 = scmp.le.s32.totalorder 1, %s23
      %p299 = scmp.lt.s32.totalorder %s23, 3
      %p300 = pnand %p298, %p299
      %p301 = pneg %p300
      // Predicated region
      $region49: #{tpu_custom_call.1} parent=5 // pred_check
        _
      $region50: #{tpu_custom_call.1} parent=5 // pred_check_branch
        %303 = sbr.rel (%p300) target = $region52
      $region51: #{tpu_custom_call.1} parent=5 // pred_region
        %s304 = ssub.s32 %s23, 1
        %s305 = sand.u32 %s36, 1
        %s306 = scalar_lea.sflag [#allocation4], %s305
        %s307 = sand.u32 %s36, 1
        %s308 = smul.addr %s307, 8
        %s309 = scalar_lea.vmem [#allocation3], %s308
        // Predicated region
        $region53: #{tpu_custom_call.1} parent=51 // pred_check
          %p310 = pneg %p49
        $region54: #{tpu_custom_call.1} parent=51 // pred_check_branch
          %312 = sbr.rel (%p310) target = $region56
        $region55: #{tpu_custom_call.1} parent=51 // pred_region
          %314 = dma.done %s306, 128
        $region56: #{tpu_custom_call.1} parent=51 // pred_fallthru
          _
        // Predicated region
        $region57: #{tpu_custom_call.1} parent=51 // pred_check
          %p315 = pneg %p154
        $region58: #{tpu_custom_call.1} parent=51 // pred_check_branch
          %317 = sbr.rel (%p315) target = $region60
        $region59: #{tpu_custom_call.1} parent=51 // pred_region
          %319 = dma.done [#allocation8], 128
        $region60: #{tpu_custom_call.1} parent=51 // pred_fallthru
          _
        // Predicated region
        $region61: #{tpu_custom_call.1} parent=51 // pred_check
          %p320 = pneg %p175
        $region62: #{tpu_custom_call.1} parent=51 // pred_check_branch
          %322 = sbr.rel (%p320) target = $region64
        $region63: #{tpu_custom_call.1} parent=51 // pred_region
          %324 = dma.done [#allocation6], 16
        $region64: #{tpu_custom_call.1} parent=51 // pred_fallthru
          _
        %325 = sfence
        %s326 = sand.u32 %s36, 1
        %s327 = scalar_lea.sflag [#allocation4], %s326
        %s328 = sand.u32 %s36, 1
        %s329 = smul.addr %s328, 8
        %s330 = scalar_lea.vmem [#allocation3], %s329
        %p331 = pneg %p49
        %p332 = pneg %p46
        %p333 = pneg %p70
        %p334 = pneg %p67
        %p335 = pneg %p91
        %p336 = pneg %p88
        %p337 = pneg %p112
        %p338 = pneg %p109
        %p339 = pneg %p133
        %p340 = pneg %p130
        %p341 = pneg %p154
        %p342 = pneg %p151
        %p343 = pneg %p175
        %p344 = pneg %p172
        %p345 = pneg %p196
        %p346 = pneg %p193
        %p347 = pneg %p222
        %p348 = pneg %p219
        %s349 = sand.u32 %s209, 1
        %s350 = scalar_lea.sflag [#allocation5], %s349
        %s351 = sand.u32 %s209, 1
        %s352 = smul.addr %s351, 8
        %s353 = scalar_lea.vmem [#allocation10], %s352
        %v354 = vld [vmem:[%s309] sm:$0xff]
        %356 = vst [vmem:[#allocation1] ss:$2 sm:$0xff] %v354
        %v357 = vld.sshfl [vmem:[#allocation1] sm:$0xff pattern:$0x75316420]
        %v358 = vld.sshfl [vmem:[#allocation1 + $0x8] sm:$0xff pattern:$0x75316420]
        %vm361 = vcmask 1043456
        %v362 = vsel %vm361, %v357, -inf
        %v363 = vsel %vm361, %v358, -inf
        %v364 = vmax.f32 %v362, %v363
        %365 = vmax.xlane.f32.xlu0 %v364
        %v366 = vpop.xlane.xlu0 %365
        %367 = vst [vmem:[#allocation1] ss:$2 sm:$0xff] %v354
        %v368 = vld.sshfl [vmem:[#allocation1] sm:$0xff pattern:$0x75316420]
        %v369 = vld.sshfl [vmem:[#allocation1 + $0x8] sm:$0xff pattern:$0x75316420]
        %v372 = vsel %vm361, %v368, 0.0
        %v373 = vsel %vm361, %v369, 0.0
        %v374 = vadd.f32 %v372, %v373
        %375 = vadd.xlane.f32.xlu0 %v374
        %v376 = vpop.xlane.xlu0 %375
        %v377 = vrcp.pop 256.0
        %v378 = vmul.f32 256.0, %v377
        %v379 = vsub.f32 1.0, %v378
        %v380 = vmul.f32 %v377, %v379
        %v381 = vadd.f32 %v377, %v380
        %vm382 = vweird.f32 %v377
        %v383 = vsel %vm382, %v377, %v381
        %v384 = vmul.f32 %v376, %v383
        %v386 = vlaneseq
        %v387 = vand.u32 %v386, 127
        %v388 = vperm.slane %v366, %v387
        %v391 = vperm.slane %v384, %v387
        %vm393 = vcmask 1040384
        %v394 = vsel %vm393, %v388, %v391
        %v395 = vld [vmem:[%s1] sm:$0xf]
        %v396 = vld [vmem:[%s2] sm:$0x1]
        %v398 = vperm.slane %v396, 0
        %vm400 = vcmask 31744
        %v402 = vsel %vm400, %v394, 0
        %v405 = vsel %vm361, %v395, 0
        %407 = vmatpush.msra.mxu0 0.0
        %408 = vmatpush.msra.mxu0 0.0
        %409 = vmatpush.msra.mxu0 0.0
        %410 = vmatpush.msra.mxu0 0.0
        %411 = vmatpush.msra.mxu0 0.0
        %412 = vmatpush.msra.mxu0 0.0
        %413 = vmatpush.msra.mxu0 0.0
        %414 = vmatpush.msra.mxu0 0.0
        %415 = vmatpush.msra.mxu0 0.0
        %416 = vmatpush.msra.mxu0 0.0
        %417 = vmatpush.msra.mxu0 0.0
        %418 = vmatpush.msra.mxu0 0.0
        %419 = vmatpush.msra.mxu0 0.0
        %420 = vmatpush.msra.mxu0 0.0
        %421 = vmatpush.msra.mxu0 0.0
        %422 = vmatpush.msra.mxu0 %v405
        %423 = vmatmul.f32.gmra.mxu0 %v402
        %v424 = vpop.f32.mrf.mxu0
        %v425 = vadd.f32 %v398, %v424
        %426 = vdwg.mxu0
        %v427 = vld [vmem:[%s3] sm:$0x3]
        %v428 = vld [vmem:[%s4] sm:$0x1]
        %v430 = vperm.slane %v428, 0
        %vm432 = vcmask 15360
        %v434 = vsel %vm432, %v425, 0
        %vm436 = vcmask 1041408
        %v438 = vsel %vm436, %v427, 0
        %440 = vmatpush.msra.mxu0 0.0
        %441 = vmatpush.msra.mxu0 0.0
        %442 = vmatpush.msra.mxu0 0.0
        %443 = vmatpush.msra.mxu0 0.0
        %444 = vmatpush.msra.mxu0 0.0
        %445 = vmatpush.msra.mxu0 0.0
        %446 = vmatpush.msra.mxu0 0.0
        %447 = vmatpush.msra.mxu0 0.0
        %448 = vmatpush.msra.mxu0 0.0
        %449 = vmatpush.msra.mxu0 0.0
        %450 = vmatpush.msra.mxu0 0.0
        %451 = vmatpush.msra.mxu0 0.0
        %452 = vmatpush.msra.mxu0 0.0
        %453 = vmatpush.msra.mxu0 0.0
        %454 = vmatpush.msra.mxu0 0.0
        %455 = vmatpush.msra.mxu0 %v438
        %456 = vmatmul.f32.gmra.mxu0 %v434
        %v457 = vpop.f32.mrf.mxu0
        %v458 = vadd.f32 %v430, %v457
        %459 = vdwg.mxu0
        %v461 = vrot.slane %v458, 1
        %v463 = vadd.f32 %v458, %v461
        %v464 = vxor.u32 %v463, 2147483648
        %v465 = vmul.f32 %v464, 1.442695
        %v466 = vpow.pop %v465
        %v467 = vadd.f32 %v466, 1.0
        %v468 = vrcp.pop %v467
        %v469 = vmul.f32 %v467, %v468
        %v470 = vsub.f32 1.0, %v469
        %v471 = vmul.f32 %v468, %v470
        %v472 = vadd.f32 %v468, %v471
        %vm473 = vweird.f32 %v467
        %vm474 = vweird.f32 %v468
        %vm475 = vmor %vm473, %vm474
        %v476 = vsel %vm475, %v468, %v472
        %v477 = vand.u32 2147483647, %v467
        %vm478 = vcmp.eq.f32.partialorder %v477, 8.507059e+37
        %v479 = vand.u32 %v467, 2147483648
        %v480 = vor.u32 1.1754944e-38, %v479
        %v481 = vsel %vm478, %v480, %v476
        %v482 = vmul.f32 1.0, %v481
        %483 = vst [vmem:[#allocation1] ss:$2 sm:$0xff] %v354
        %v484 = vld.sshfl [vmem:[#allocation1] sm:$0xff pattern:$0x75316420]
        %v485 = vld.sshfl [vmem:[#allocation1 + $0x8] sm:$0xff pattern:$0x75316420]
        %v488 = vsel %vm361, %v484, -inf
        %v489 = vrot.slane %v488, 4
        %v490 = vmax.f32 %v488, %v489
        %v491 = vrot.slane %v490, 2
        %v492 = vmax.f32 %v490, %v491
        %v493 = vrot.slane %v492, 1
        %v494 = vmax.f32 %v492, %v493
        %v495 = vsel %vm361, %v485, -inf
        %v496 = vrot.slane %v495, 4
        %v497 = vmax.f32 %v495, %v496
        %v498 = vrot.slane %v497, 2
        %v499 = vmax.f32 %v497, %v498
        %v500 = vrot.slane %v499, 1
        %v501 = vmax.f32 %v499, %v500
        %502 = vst [vmem:[#allocation1] ss:$2 sm:$0xff] %v354
        %v503 = vld.sshfl [vmem:[#allocation1] sm:$0xff pattern:$0x75316420]
        %v504 = vld.sshfl [vmem:[#allocation1 + $0x8] sm:$0xff pattern:$0x75316420]
        %v507 = vsel %vm361, %v503, 0.0
        %v508 = vrot.slane %v507, 4
        %v509 = vadd.f32 %v507, %v508
        %v510 = vrot.slane %v509, 2
        %v511 = vadd.f32 %v509, %v510
        %v512 = vrot.slane %v511, 1
        %v513 = vadd.f32 %v511, %v512
        %v514 = vsel %vm361, %v504, 0.0
        %v515 = vrot.slane %v514, 4
        %v516 = vadd.f32 %v514, %v515
        %v517 = vrot.slane %v516, 2
        %v518 = vadd.f32 %v516, %v517
        %v519 = vrot.slane %v518, 1
        %v520 = vadd.f32 %v518, %v519
        %v521 = vrcp.pop 4.0
        %v522 = vmul.f32 4.0, %v521
        %v523 = vsub.f32 1.0, %v522
        %v524 = vmul.f32 %v521, %v523
        %v525 = vadd.f32 %v521, %v524
        %vm526 = vweird.f32 %v521
        %v527 = vsel %vm526, %v521, %v525
        %v528 = vmul.f32 %v513, %v527
        %v529 = vmul.f32 %v520, %v527
        %v530 = vld [vmem:[#allocation7] sm:$0xff]
        %531 = vrot.lane.b32.xlu0 %v494, 17
        %v532 = vpop.permute.xlu0 %531
        %533 = vrot.lane.b32.xlu0 %v501, 17
        %v534 = vpop.permute.xlu0 %533
        %vm535 = vcmp.lt.s32.totalorder %v387, 17
        %v536 = vsel %vm535, %v532, %v534
        %v537 = vsel %vm535, %v534, %v532
        %538 = vrot.lane.b32.xlu0 %v528, 17
        %v539 = vpop.permute.xlu0 %538
        %540 = vrot.lane.b32.xlu0 %v529, 17
        %v541 = vpop.permute.xlu0 %540
        %v542 = vsel %vm535, %v539, %v541
        %v543 = vsel %vm535, %v541, %v539
        %s544 = sld [smem:[#allocation9]]
        %v545 = vstv %s544
        %v546 = vmul.f32 %v545, %v537
        %v547 = vmul.f32 %v545, %v536
        %s548 = sld [smem:[#allocation9 + $0x9]]
        %v549 = vstv %s548
        %v550 = vmul.f32 %v549, %v543
        %v551 = vmul.f32 %v549, %v542
        %v552 = vadd.f32 %v546, %v550
        %v553 = vadd.f32 %v547, %v551
        %v555 = vrot.slane %v530, 6
        %v556 = vrot.slane %v555, 4
        %v558 = vmul.f32 %v530, %v556
        %v561 = vrot.slane %v553, 4
        %v562 = vsel %vm361, %v552, %v561
        %v564 = vmul.f32 %v558, %v562
        %565 = vrot.lane.b32.xlu0 %v494, 16
        %v566 = vpop.permute.xlu0 %565
        %567 = vrot.lane.b32.xlu0 %v501, 16
        %v568 = vpop.permute.xlu0 %567
        %vm569 = vcmp.lt.s32.totalorder %v387, 16
        %v570 = vsel %vm569, %v566, %v568
        %v571 = vsel %vm569, %v568, %v566
        %572 = vrot.lane.b32.xlu0 %v528, 16
        %v573 = vpop.permute.xlu0 %572
        %574 = vrot.lane.b32.xlu0 %v529, 16
        %v575 = vpop.permute.xlu0 %574
        %v576 = vsel %vm569, %v573, %v575
        %v577 = vsel %vm569, %v575, %v573
        %s578 = sld [smem:[#allocation9 + $0x1]]
        %v579 = vstv %s578
        %v580 = vmul.f32 %v579, %v571
        %v581 = vmul.f32 %v579, %v570
        %s582 = sld [smem:[#allocation9 + $0xa]]
        %v583 = vstv %s582
        %v584 = vmul.f32 %v583, %v577
        %v585 = vmul.f32 %v583, %v576
        %v586 = vadd.f32 %v580, %v584
        %v587 = vadd.f32 %v581, %v585
        %v590 = vrot.slane %v587, 4
        %v591 = vsel %vm361, %v586, %v590
        %v593 = vmul.f32 %v530, %v591
        %v594 = vadd.f32 %v564, %v593
        %595 = vrot.lane.b32.xlu0 %v494, 15
        %v596 = vpop.permute.xlu0 %595
        %597 = vrot.lane.b32.xlu0 %v501, 15
        %v598 = vpop.permute.xlu0 %597
        %vm599 = vcmp.lt.s32.totalorder %v387, 15
        %v600 = vsel %vm599, %v596, %v598
        %v601 = vsel %vm599, %v598, %v596
        %602 = vrot.lane.b32.xlu0 %v528, 15
        %v603 = vpop.permute.xlu0 %602
        %604 = vrot.lane.b32.xlu0 %v529, 15
        %v605 = vpop.permute.xlu0 %604
        %v606 = vsel %vm599, %v603, %v605
        %v607 = vsel %vm599, %v605, %v603
        %s608 = sld [smem:[#allocation9 + $0x2]]
        %v609 = vstv %s608
        %v610 = vmul.f32 %v609, %v601
        %v611 = vmul.f32 %v609, %v600
        %s612 = sld [smem:[#allocation9 + $0xb]]
        %v613 = vstv %s612
        %v614 = vmul.f32 %v613, %v607
        %v615 = vmul.f32 %v613, %v606
        %v616 = vadd.f32 %v610, %v614
        %v617 = vadd.f32 %v611, %v615
        %v618 = vrot.slane %v530, 7
        %v619 = vrot.slane %v618, 4
        %v621 = vmul.f32 %v530, %v619
        %v624 = vrot.slane %v617, 4
        %v625 = vsel %vm361, %v616, %v624
        %v627 = vmul.f32 %v621, %v625
        %v628 = vadd.f32 %v594, %v627
        %629 = vrot.lane.b32.xlu0 %v494, 1
        %v630 = vpop.permute.xlu0 %629
        %631 = vrot.lane.b32.xlu0 %v501, 1
        %v632 = vpop.permute.xlu0 %631
        %vm633 = vcmp.lt.s32.totalorder %v387, 1
        %v634 = vsel %vm633, %v630, %v632
        %v635 = vsel %vm633, %v632, %v630
        %636 = vrot.lane.b32.xlu0 %v528, 1
        %v637 = vpop.permute.xlu0 %636
        %638 = vrot.lane.b32.xlu0 %v529, 1
        %v639 = vpop.permute.xlu0 %638
        %v640 = vsel %vm633, %v637, %v639
        %v641 = vsel %vm633, %v639, %v637
        %s642 = sld [smem:[#allocation9 + $0x3]]
        %v643 = vstv %s642
        %v644 = vmul.f32 %v643, %v635
        %v645 = vmul.f32 %v643, %v634
        %s646 = sld [smem:[#allocation9 + $0xc]]
        %v647 = vstv %s646
        %v648 = vmul.f32 %v647, %v641
        %v649 = vmul.f32 %v647, %v640
        %v650 = vadd.f32 %v644, %v648
        %v651 = vadd.f32 %v645, %v649
        %v654 = vrot.slane %v651, 4
        %v655 = vsel %vm361, %v650, %v654
        %v656 = vrot.slane %v655, 6
        %v658 = vmul.f32 %v530, %v656
        %v660 = vrot.slane %v658, 6
        %v661 = vrot.slane %v660, 4
        %v663 = vadd.f32 %v628, %v661
        %s664 = sld [smem:[#allocation9 + $0x4]]
        %v665 = vstv %s664
        %v666 = vmul.f32 %v665, %v494
        %v667 = vmul.f32 %v665, %v501
        %s668 = sld [smem:[#allocation9 + $0xd]]
        %v669 = vstv %s668
        %v670 = vmul.f32 %v669, %v528
        %v671 = vmul.f32 %v669, %v529
        %v672 = vadd.f32 %v666, %v670
        %v673 = vadd.f32 %v667, %v671
        %v676 = vrot.slane %v673, 4
        %v677 = vsel %vm361, %v672, %v676
        %v679 = vadd.f32 %v663, %v677
        %680 = vrot.lane.b32.xlu0 %v494, 127
        %v681 = vpop.permute.xlu0 %680
        %682 = vrot.lane.b32.xlu0 %v501, 127
        %v683 = vpop.permute.xlu0 %682
        %vm684 = vcmp.lt.s32.totalorder %v387, 127
        %v685 = vsel %vm684, %v681, %v683
        %v686 = vsel %vm684, %v683, %v681
        %687 = vrot.lane.b32.xlu0 %v528, 127
        %v688 = vpop.permute.xlu0 %687
        %689 = vrot.lane.b32.xlu0 %v529, 127
        %v690 = vpop.permute.xlu0 %689
        %v691 = vsel %vm684, %v688, %v690
        %v692 = vsel %vm684, %v690, %v688
        %s693 = sld [smem:[#allocation9 + $0x5]]
        %v694 = vstv %s693
        %v695 = vmul.f32 %v694, %v685
        %v696 = vmul.f32 %v694, %v686
        %s697 = sld [smem:[#allocation9 + $0xe]]
        %v698 = vstv %s697
        %v699 = vmul.f32 %v698, %v691
        %v700 = vmul.f32 %v698, %v692
        %v701 = vadd.f32 %v695, %v699
        %v702 = vadd.f32 %v696, %v700
        %v705 = vrot.slane %v702, 4
        %v706 = vsel %vm361, %v701, %v705
        %v707 = vrot.slane %v706, 5
        %v709 = vmul.f32 %v530, %v707
        %v711 = vrot.slane %v709, 7
        %v712 = vrot.slane %v711, 4
        %v714 = vadd.f32 %v679, %v712
        %715 = vrot.lane.b32.xlu0 %v494, 113
        %v716 = vpop.permute.xlu0 %715
        %717 = vrot.lane.b32.xlu0 %v501, 113
        %v718 = vpop.permute.xlu0 %717
        %vm719 = vcmp.lt.s32.totalorder %v387, 113
        %v720 = vsel %vm719, %v716, %v718
        %v721 = vsel %vm719, %v718, %v716
        %722 = vrot.lane.b32.xlu0 %v528, 113
        %v723 = vpop.permute.xlu0 %722
        %724 = vrot.lane.b32.xlu0 %v529, 113
        %v725 = vpop.permute.xlu0 %724
        %v726 = vsel %vm719, %v723, %v725
        %v727 = vsel %vm719, %v725, %v723
        %s728 = sld [smem:[#allocation9 + $0x6]]
        %v729 = vstv %s728
        %v730 = vmul.f32 %v729, %v720
        %v731 = vmul.f32 %v729, %v721
        %s732 = sld [smem:[#allocation9 + $0xf]]
        %v733 = vstv %s732
        %v734 = vmul.f32 %v733, %v726
        %v735 = vmul.f32 %v733, %v727
        %v736 = vadd.f32 %v730, %v734
        %v737 = vadd.f32 %v731, %v735
        %v738 = vrot.slane %v530, 5
        %v739 = vrot.slane %v738, 4
        %v741 = vmul.f32 %v530, %v739
        %v744 = vrot.slane %v737, 4
        %v745 = vsel %vm361, %v736, %v744
        %v746 = vrot.slane %v745, 7
        %v748 = vmul.f32 %v741, %v746
        %v750 = vrot.slane %v748, 5
        %v751 = vrot.slane %v750, 4
        %v753 = vadd.f32 %v714, %v751
        %754 = vrot.lane.b32.xlu0 %v494, 112
        %v755 = vpop.permute.xlu0 %754
        %756 = vrot.lane.b32.xlu0 %v501, 112
        %v757 = vpop.permute.xlu0 %756
        %vm758 = vcmp.lt.s32.totalorder %v387, 112
        %v759 = vsel %vm758, %v755, %v757
        %v760 = vsel %vm758, %v757, %v755
        %761 = vrot.lane.b32.xlu0 %v528, 112
        %v762 = vpop.permute.xlu0 %761
        %763 = vrot.lane.b32.xlu0 %v529, 112
        %v764 = vpop.permute.xlu0 %763
        %v765 = vsel %vm758, %v762, %v764
        %v766 = vsel %vm758, %v764, %v762
        %s767 = sld [smem:[#allocation9 + $0x7]]
        %v768 = vstv %s767
        %v769 = vmul.f32 %v768, %v759
        %v770 = vmul.f32 %v768, %v760
        %s771 = sld [smem:[#allocation9 + $0x10]]
        %v772 = vstv %s771
        %v773 = vmul.f32 %v772, %v765
        %v774 = vmul.f32 %v772, %v766
        %v775 = vadd.f32 %v769, %v773
        %v776 = vadd.f32 %v770, %v774
        %v779 = vrot.slane %v776, 4
        %v780 = vsel %vm361, %v775, %v779
        %v781 = vrot.slane %v780, 7
        %v783 = vmul.f32 %v530, %v781
        %v785 = vrot.slane %v783, 5
        %v786 = vrot.slane %v785, 4
        %v788 = vadd.f32 %v753, %v786
        %789 = vrot.lane.b32.xlu0 %v494, 111
        %v790 = vpop.permute.xlu0 %789
        %791 = vrot.lane.b32.xlu0 %v501, 111
        %v792 = vpop.permute.xlu0 %791
        %vm793 = vcmp.lt.s32.totalorder %v387, 111
        %v794 = vsel %vm793, %v790, %v792
        %v795 = vsel %vm793, %v792, %v790
        %796 = vrot.lane.b32.xlu0 %v528, 111
        %v797 = vpop.permute.xlu0 %796
        %798 = vrot.lane.b32.xlu0 %v529, 111
        %v799 = vpop.permute.xlu0 %798
        %v800 = vsel %vm793, %v797, %v799
        %v801 = vsel %vm793, %v799, %v797
        %s802 = sld [smem:[#allocation9 + $0x8]]
        %v803 = vstv %s802
        %v804 = vmul.f32 %v803, %v794
        %v805 = vmul.f32 %v803, %v795
        %s806 = sld [smem:[#allocation9 + $0x11]]
        %v807 = vstv %s806
        %v808 = vmul.f32 %v807, %v800
        %v809 = vmul.f32 %v807, %v801
        %v810 = vadd.f32 %v804, %v808
        %v811 = vadd.f32 %v805, %v809
        %v814 = vrot.slane %v811, 4
        %v815 = vsel %vm361, %v810, %v814
        %v816 = vrot.slane %v815, 7
        %v818 = vmul.f32 %v558, %v816
        %v820 = vrot.slane %v818, 5
        %v821 = vrot.slane %v820, 4
        %v823 = vadd.f32 %v788, %v821
        %s824 = sld [smem:[#allocation2]]
        %v825 = vstv %s824
        %v826 = vadd.f32 %v823, %v825
        %v827 = vxor.u32 %v826, 2147483648
        %v828 = vmul.f32 %v827, 1.442695
        %v829 = vpow.pop %v828
        %v830 = vadd.f32 %v829, 1.0
        %v831 = vrcp.pop %v830
        %v832 = vmul.f32 %v830, %v831
        %v833 = vsub.f32 1.0, %v832
        %v834 = vmul.f32 %v831, %v833
        %v835 = vadd.f32 %v831, %v834
        %vm836 = vweird.f32 %v830
        %vm837 = vweird.f32 %v831
        %vm838 = vmor %vm836, %vm837
        %v839 = vsel %vm838, %v831, %v835
        %v840 = vand.u32 2147483647, %v830
        %vm841 = vcmp.eq.f32.partialorder %v840, 8.507059e+37
        %v842 = vand.u32 %v830, 2147483648
        %v843 = vor.u32 1.1754944e-38, %v842
        %v844 = vsel %vm841, %v843, %v839
        %v845 = vmul.f32 1.0, %v844
        %v846 = vperm.slane %v482, 0
        %v847 = vlaneseq
        %v848 = vshrl.u32 %v847, 7
        %850 = vset.pattern.permute.xlu0 %v848
        %851 = vperm.xlu0 %850, %v846
        %v852 = vpop.permute.xlu0 %851
        %v854 = vperm.slane %v845, 0
        %v855 = vperm.slane %v845, 4
        %v858 = vperm.slane %v854, 0
        %v859 = vperm.slane %v855, 0
        %860 = vst [vmem:[#allocation1] ss:$2 sm:$0xff] %v354
        %v861 = vld.sshfl [vmem:[#allocation1] sm:$0xff pattern:$0x75316420]
        %v862 = vld.sshfl [vmem:[#allocation1 + $0x8] sm:$0xff pattern:$0x75316420]
        %v865 = vmul.f32 %v858, %v861
        %v866 = vmul.f32 %v859, %v862
        %v867 = vmul.f32 %v852, %v865
        %v868 = vmul.f32 %v852, %v866
        %v871 = vrot.slane %v868, 4
        %v872 = vsel %vm361, %v867, %v871
        %874 = vst [vmem:[%s353] sm:$0xff] %v872
        %s875 = sand.u32 %s209, 1
        %s876 = scalar_lea.sflag [#allocation5], %s875
        %s877 = sand.u32 %s209, 1
        %s878 = smul.addr %s877, 8
        %s879 = scalar_lea.vmem [#allocation10], %s878
        // Predicated region
        $region65: #{tpu_custom_call.1} parent=51 // pred_check
          %p880 = pneg %p219
        $region66: #{tpu_custom_call.1} parent=51 // pred_check_branch
          %882 = sbr.rel (%p880) target = $region68
        $region67: #{tpu_custom_call.1} parent=51 // pred_region
          %884 = vsyncadd %s876, 0
          %s885 = smul.addr %s28, 2
          %s886 = smul.addr %s885, 4
          %s887 = scalar_lea.hbm %s8, %s886
          %s889 = sshll.u32 %s879, 4
          %s890 = int_to_ptr.vmem [resolvable:$true] %s889
          %s891 = sshll.u32 %s887, 4
          %s892 = int_to_ptr.hbm [resolvable:$true] %s891
          %894 = dma.vmem_to_hbm [thread:$0]  %s890, 128, %s892, %s876
        $region68: #{tpu_custom_call.1} parent=51 // pred_fallthru
          _
      $region52: #{tpu_custom_call.1} parent=5 // pred_fallthru
        _
      %p895 = scmp.le.s32.totalorder 2, %s23
      // Predicated region
      $region69: #{tpu_custom_call.1} parent=5 // pred_check
        %p896 = pneg %p895
      $region70: #{tpu_custom_call.1} parent=5 // pred_check_branch
        %898 = sbr.rel (%p896) target = $region72
      $region71: #{tpu_custom_call.1} parent=5 // pred_region
        %s899 = ssub.s32 %s23, 2
        // Predicated region
        $region73: #{tpu_custom_call.1} parent=71 // pred_check
          %p900 = pneg %p225
        $region74: #{tpu_custom_call.1} parent=71 // pred_check_branch
          %902 = sbr.rel (%p900) target = $region76
        $region75: #{tpu_custom_call.1} parent=71 // pred_region
          %s903 = sand.u32 %s210, 1
          %s904 = scalar_lea.sflag [#allocation5], %s903
          %s905 = sand.u32 %s210, 1
          %s906 = smul.addr %s905, 8
          %s907 = scalar_lea.vmem [#allocation10], %s906
          %909 = dma.done %s904, 128
        $region76: #{tpu_custom_call.1} parent=71 // pred_fallthru
          _
      $region72: #{tpu_custom_call.1} parent=5 // pred_fallthru
        _
    $region6: #{tpu_custom_call.1} parent=1 // loop_footer
      %s27 = sadd.s32 1, %s23
    $region7: #{tpu_custom_call.1} parent=1 // loop_footer_branch
      %22 = sbr.rel target = $region3
    $region8: #{tpu_custom_call.1} parent=1 // loop_exit
      _
    %910 = vsyncpa [#allocation4], 1
    %s911 = scalar_lea.sflag [#allocation4], 1
    %912 = vsyncpa %s911, 1
    %913 = vsyncpa [#allocation8], 1
    %914 = vsyncpa [#allocation5], 1
    %s915 = scalar_lea.sflag [#allocation5], 1
    %916 = vsyncpa %s915, 1
    %917 = vsyncpa [#allocation6], 1
    %s918 = scalar_lea.sflag [#allocation6], 1
    %919 = vsyncpa %s918, 1

</llo_original>
